<compile_context>
chip_gen: v5e
topology: v5e:2x2
jax: 0.10.0
libtpu: 0.0.40
codegen_flags: <defaults>
</compile_context>

<pallas_src>
import functools

import jax
import jax.numpy as jnp
from jax import lax
from jax.experimental import pallas as pl
from jax.experimental.pallas import tpu as pltpu


def _pixel_corr_kernel(ker_ref, feat_ref, out_ref, *, out_scale):
    # ker_ref:  (BBLK, C, ZP)   z flattened per batch (channels contracted)
    # feat_ref: (BBLK, C, QT)   x flattened, Q tile on the lane axis
    # out_ref:  (BBLK, ZP, QT)
    acc = lax.dot_general(
        ker_ref[...],
        feat_ref[...],
        dimension_numbers=(((1,), (1,)), ((0,), (0,))),  # contract C, batch B
        preferred_element_type=jnp.float32,
    )
    out_ref[...] = (acc * out_scale).astype(out_ref.dtype)


def _vmem_budget_and_limit():
    """Generation-aware (block-footprint budget, scoped-VMEM limit) in bytes."""
    try:
        physical = int(pltpu.get_tpu_info().vmem_capacity_bytes)
    except Exception:
        physical = 64 << 20  # conservative fallback (v7x per-TensorCore VMEM)
    physical = max(physical, 32 << 20)
    budget = (physical * 5) // 8                                 # 40 MiB v7x, 80 MiB v5e/v6e
    limit = min(physical - (4 << 20), budget + physical // 8)    # 48 MiB v7x, 96 MiB v5e/v6e
    return budget, limit


def _divisors_desc(n):
    return sorted((d for d in range(1, n + 1) if n % d == 0), reverse=True)


def _choose_tiles(b, c, zp, q, in_itemsize, out_itemsize, budget_bytes, min_steps):
    """Pick (BBLK, Q_TILE) under the VMEM budget, then guarantee >= min_steps grid steps."""

    def block_bytes(bblk, qt, feat_bufs=2):
        ker_b = bblk * c * zp * in_itemsize
        feat_b = bblk * c * qt * in_itemsize
        out_b = bblk * zp * qt * out_itemsize
        return 2 * (ker_b + out_b) + feat_bufs * feat_b

    # Q tile: whole Q if a single (bblk=1) block fits, else largest multiple of 128.
    if block_bytes(1, q) <= budget_bytes:
        q_tile = q
    else:
        per_col = block_bytes(1, 1) - block_bytes(1, 0)
        fixed = block_bytes(1, 0)
        max_cols = max(128, (budget_bytes - fixed) // max(per_col, 1))
        q_tile = 128 * max(1, max_cols // 128)

    # Batch block: largest divisor of b whose block still fits the budget.
    bblk = 1
    for d in _divisors_desc(b):
        if block_bytes(d, q_tile) <= budget_bytes:
            bblk = d
            break

    # Guarantee pipelining / megacore work: >= min_steps grid steps when splittable.
    def steps(bb, qt):
        return (b // bb) * pl.cdiv(q, qt)

    while steps(bblk, q_tile) < min_steps:
        if bblk > 1:
            bblk = max(d for d in range(1, bblk) if b % d == 0)   # next smaller divisor
        elif q_tile > 128 and q > 128:
            q_tile = 128 * max(1, (min(q_tile, q) - 1) // 128)    # stays a multiple of 128
        else:
            break  # too small to split further; accept the short grid

    return bblk, q_tile, block_bytes


def siamfc_head_pixel_face_correlation(z, x, out_scale=0.001, *, compute_dtype=None,
                                       out_dtype=None, feat_buffers=2,
                                       min_grid_steps=4):
    """Pallas equivalent of SiamFC_HEAD_pixel_face_correlation.forward(z, x)."""
    b, c, zh, zw = z.shape
    bx, cx, h, w = x.shape
    assert b == bx and c == cx, "batch / channel dims of z and x must match"

    zp = zh * zw  # kernel pixels
    q = h * w     # feature pixels

    # Layout plumbing only (free reshapes): contraction over C is handled in-kernel,
    # so z is never transposed in HBM and x is never padded.
    ker = z.reshape(b, c, zp)
    feat = x.reshape(b, c, q)
    if compute_dtype is not None:
        ker = ker.astype(compute_dtype)
        feat = feat.astype(compute_dtype)

    if out_dtype is None:
        out_dtype = x.dtype
    in_itemsize = jnp.dtype(ker.dtype).itemsize
    out_itemsize = jnp.dtype(out_dtype).itemsize

    budget, vmem_limit = _vmem_budget_and_limit()
    bblk, q_tile, block_bytes = _choose_tiles(
        b, c, zp, q, in_itemsize, out_itemsize, budget, min_grid_steps)

    grid = (b // bblk, pl.cdiv(q, q_tile))
    total_steps = grid[0] * grid[1]

    ker_map = lambda bi, qi: (bi, 0, 0)
    qdep_map = lambda bi, qi: (bi, 0, qi)

    # Dominant HBM stream; optionally triple-buffered (opt-in, sweep before keeping).
    feat_spec = pl.BlockSpec((bblk, c, q_tile), qdep_map)
    if (feat_buffers > 2 and total_steps >= feat_buffers
            and block_bytes(bblk, q_tile, feat_bufs=feat_buffers) <= budget
            and hasattr(pl, "Buffered")):
        try:
            feat_spec = pl.BlockSpec((bblk, c, q_tile), qdep_map,
                                     pipeline_mode=pl.Buffered(feat_buffers))
        except TypeError:
            pass  # older jax without pipeline_mode: keep default double-buffering

    cost = pl.CostEstimate(
        flops=2 * b * zp * c * q,
        transcendentals=0,
        bytes_accessed=b * c * (q + zp) * in_itemsize + b * zp * q * out_itemsize,
    )

    kernel = functools.partial(_pixel_corr_kernel, out_scale=out_scale)

    out = pl.pallas_call(
        kernel,
        out_shape=jax.ShapeDtypeStruct((b, zp, q), out_dtype),
        grid=grid,
        in_specs=[
            pl.BlockSpec((bblk, c, zp), ker_map),   # tiny; re-read per Q tile
            feat_spec,
        ],
        out_specs=pl.BlockSpec((bblk, zp, q_tile), qdep_map),
        compiler_params=pltpu.CompilerParams(
            dimension_semantics=("parallel", "parallel"),
            vmem_limit_bytes=int(vmem_limit),
        ),
        cost_estimate=cost,
    )(ker, feat)

    # Free (layout-compatible) reshape: (B, ZP, Q) -> (B, ZH*ZW, H, W),
    # matching corr.reshape(*corr.shape[:2], h, w) in the PyTorch module.
    return out.reshape(b, zp, h, w)


def _reference(z, x, out_scale=0.001):
    b, c, zh, zw = z.shape
    _, _, h, w = x.shape
    ker = jnp.transpose(z.reshape(b, c, zh * zw), (0, 2, 1))
    feat = x.reshape(b, c, h * w)
    corr = jnp.einsum("bpc,bcq->bpq", ker, feat)
    return (corr * out_scale).reshape(b, zh * zw, h, w)


if __name__ == "__main__":
    key = jax.random.PRNGKey(0)
    kz, kx = jax.random.split(key)

    # z: exemplar features (B, C, ZH, ZW); x: search features (B, C, H, W)
    z = jax.random.normal(kz, (2, 4, 4, 4), dtype=jnp.float32)
    x = jax.random.normal(kx, (2, 4, 16, 16), dtype=jnp.float32)

    out = jax.block_until_ready(siamfc_head_pixel_face_correlation(z, x, out_scale=0.001))
    ref = _reference(z, x, out_scale=0.001)
    assert out.shape == (2, 16, 16, 16), out.shape
    assert jnp.allclose(out, ref, atol=1e-5, rtol=1e-5), "mismatch vs reference (f32)"

    # Ragged-Q path: h*w = 289 is not a multiple of 128; Pallas masks the last
    # Q block on load/store (no wrapper pad/slice round-trips anymore).
    x2 = jax.random.normal(kx, (2, 4, 17, 17), dtype=jnp.float32)
    out2 = jax.block_until_ready(siamfc_head_pixel_face_correlation(z, x2, out_scale=0.001))
    ref2 = _reference(z, x2, out_scale=0.001)
    assert out2.shape == (2, 16, 17, 17), out2.shape
    assert jnp.allclose(out2, ref2, atol=1e-5, rtol=1e-5), "mismatch vs reference (ragged Q)"

    # bf16-input path (recommended on v5e/v6e, where the kernel is HBM-bound);
    # looser tolerance since inputs are rounded to bf16.
    out_bf16 = jax.block_until_ready(
        siamfc_head_pixel_face_correlation(z, x, out_scale=0.001,
                                           compute_dtype=jnp.bfloat16))
    assert out_bf16.shape == (2, 16, 16, 16)
    assert jnp.allclose(out_bf16, ref, atol=1e-2, rtol=1e-1), "bf16 path diverged"

    # TODO(synk): the F.conv2d branch in the PyTorch module is dead code (its
    # result is overwritten before return), so it is intentionally not lowered.
    print("KERNEL_OK")
</pallas_src>

<mosaic_0001>
module attributes {stable_mosaic.version = 11 : i64} {
  func.func @_pixel_corr_kernel(%arg0: i32, %arg1: i32, %arg2: memref<1x4x16xf32, #tpu.memory_space<vmem>>, %arg3: memref<1x4x128xf32, #tpu.memory_space<vmem>>, %arg4: memref<1x16x128xf32, #tpu.memory_space<vmem>>) attributes {dimension_semantics = [#tpu.dimension_semantics<parallel>, #tpu.dimension_semantics<parallel>], iteration_bounds = array<i64: 2, 2>, scalar_prefetch = 0 : i64, scratch_operands = 0 : i64, tpu.core_type = #tpu.core_type<tc>, window_params = [{transform_indices = @transform_0, window_bounds = array<i64: 1, 4, 16>}, {transform_indices = @transform_1, window_bounds = array<i64: 1, 4, 128>}, {transform_indices = @transform_2, window_bounds = array<i64: 1, 16, 128>}]} {
    %c0 = arith.constant 0 : index
    %c0_0 = arith.constant 0 : index
    %c0_1 = arith.constant 0 : index
    %0 = vector.load %arg2[%c0, %c0_0, %c0_1] : memref<1x4x16xf32, #tpu.memory_space<vmem>>, vector<1x4x16xf32>
    %c0_2 = arith.constant 0 : index
    %c0_3 = arith.constant 0 : index
    %c0_4 = arith.constant 0 : index
    %1 = vector.load %arg3[%c0_2, %c0_3, %c0_4] : memref<1x4x128xf32, #tpu.memory_space<vmem>>, vector<1x4x128xf32>
    %cst = arith.constant dense<0.000000e+00> : vector<1x16x128xf32>
    %2 = tpu.matmul %0, %1, %cst {dimension_numbers = #tpu.dot_dimension_numbers<[1], [1], [2], [2], [0, 0, 0, 2, 1, 2], [0], [0]>} : vector<1x4x16xf32>, vector<1x4x128xf32>, vector<1x16x128xf32> -> vector<1x16x128xf32>
    %cst_5 = arith.constant 1.000000e-03 : f32
    %3 = vector.broadcast %cst_5 : f32 to vector<1x16x128xf32>
    %4 = arith.mulf %2, %3 : vector<1x16x128xf32>
    %c0_6 = arith.constant 0 : index
    %c0_7 = arith.constant 0 : index
    %c0_8 = arith.constant 0 : index
    %5 = vector.load %arg4[%c0_6, %c0_7, %c0_8] : memref<1x16x128xf32, #tpu.memory_space<vmem>>, vector<1x16x128xf32>
    tpu.vector_store %arg4[%c0_6, %c0_7, %c0_8], %4 {strides = array<i32>} : memref<1x16x128xf32, #tpu.memory_space<vmem>>, vector<1x16x128xf32>,
    return
  }
  func.func @transform_0(%arg0: i32, %arg1: i32) -> (i32, i32, i32) {
    %c0_i32 = arith.constant 0 : i32
    %c0_i32_0 = arith.constant 0 : i32
    %c0_i32_1 = arith.constant 0 : i32
    return %arg0, %c0_i32, %c0_i32_0 : i32, i32, i32
  }
  func.func @transform_1(%arg0: i32, %arg1: i32) -> (i32, i32, i32) {
    %c0_i32 = arith.constant 0 : i32
    %c0_i32_0 = arith.constant 0 : i32
    return %arg0, %c0_i32, %arg1 : i32, i32, i32
  }
  func.func @transform_2(%arg0: i32, %arg1: i32) -> (i32, i32, i32) {
    %c0_i32 = arith.constant 0 : i32
    %c0_i32_0 = arith.constant 0 : i32
    return %arg0, %c0_i32, %arg1 : i32, i32, i32
  }
}

</mosaic_0001>

<llo_original>
// kernel: tpu_custom_call.1
$region0: #{tpu_custom_call.1}
  #allocation0 [shape = 'u32[]', space=smem, size = 0x4, offset = 0x4, fixed_abs, tag = 'smem constant byte address 0x4 - core index']
  #allocation1 [shape = 'u32[72,128]{1,0:T(1,128)}', space=vmem, size = 0x9000, scoped, tag = 'internal scratch']
  %s0 = inlined_call_operand.hbm [shape: f32[2,4,16], index: 0, kind: input, shape index: {}]
  %s1 = inlined_call_operand.hbm [shape: f32[2,4,256], index: 1, kind: input, shape index: {}]
  %s2 = inlined_call_operand.hbm [shape: f32[2,16,256], index: 2, kind: output, shape index: {}]
  %s3 = sld [smem:[#allocation0]]
  $region49: #{tpu_custom_call.1} parent=0
    _
  %s5 = ssub.s32 1, %s3
  %s6 = scalar_select 0, %s5, %s3
  $region1: #{tpu_custom_call.1} parent=0
    #allocation2 [shape = 'u8[4096]{0}', space=vmem, size = 0x1000, scoped, tag = 'input window, operand 0']
    #allocation3 [shape = 's32[2]{0}', space=sflag, size = 0x8, scoped, tag = 'scoped memory for tpu_custom_call.1']
    #allocation4 [shape = 's32[2]{0}', space=sflag, size = 0x8, scoped, tag = 'scoped memory for tpu_custom_call.1']
    #allocation5 [shape = 'u8[4096]{0}', space=vmem, size = 0x1000, scoped, tag = 'input window, operand 1']
    #allocation6 [shape = 's32[2]{0}', space=sflag, size = 0x8, scoped, tag = 'scoped memory for tpu_custom_call.1']
    #allocation7 [shape = 'u8[16384]{0}', space=vmem, size = 0x4000, scoped, tag = 'output window, operand 0']
    %7 = vsyncpa [#allocation3], 0
    %s8 = scalar_lea.sflag [#allocation3], 1
    %9 = vsyncpa %s8, 0
    %10 = vsyncpa [#allocation6], 0
    %s11 = scalar_lea.sflag [#allocation6], 1
    %12 = vsyncpa %s11, 0
    %13 = vsyncpa [#allocation4], 0
    %s14 = scalar_lea.sflag [#allocation4], 1
    %15 = vsyncpa %s14, 0
    loop: start=0, step=1, limit=6
    $region2: #{tpu_custom_call.1} parent=1 // loop_pre_header
      _
    $region3: #{tpu_custom_call.1} parent=1 // loop_header
      %s17 = sphi 0, %s21
      %p18 = scmp.ge.s32.totalorder %s17, 6
      %s24 = sphi 0, %s36
      %s25 = sphi 0, %s32
      %s26 = sphi 0, %s24
      %s27 = sphi 0, %s25
      %s28 = sphi 0, %s26
      %s29 = sphi 0, %s27
      %s39 = sphi 0, %s41
      %s42 = sphi 0, %s39
      %s43 = sphi 0, %s42
      %s59 = sphi 0, %s43
      %s67 = sphi 0, %s69
      %s70 = sphi 0, %s67
      %s71 = sphi 0, %s70
      %s87 = sphi 0, %s71
      %s95 = sphi 0, %s97
      %s98 = sphi 0, %s95
      %s99 = sphi 0, %s98
      %s115 = sphi 0, %s99
    $region4: #{tpu_custom_call.1} parent=1 // loop_header_branch
      %20 = sbr.rel (%p18) target = $region8
    $region5: #{tpu_custom_call.1} parent=1 // loop_body
      %s22 = ssub.s32 %s17, 1
      %s23 = ssub.s32 %s17, 2
      %s30 = sadd.s32 1, %s25
      %p31 = scmp.ge.s32.totalorder %s30, 2
      %s32 = scalar_select %p31, 0, %s30
      %s33 = sadd.s32 1, %s24
      %s34 = scalar_select %p31, %s33, %s24
      %p35 = scmp.ge.s32.totalorder %s34, 2
      %s36 = scalar_select %p35, 0, %s34
      %s37 = ssub.s32 %s24, %s36
      %p38 = scmp.eq.s32.totalorder %s37, 0
      %s40 = sadd.s32 %s39, 1
      %s41 = scalar_select %p38, %s39, %s40
      %p44 = pneg %p38
      %p45 = scmp.eq.s32.totalorder %s17, 3
      %p46 = por %p44, %p45
      %p47 = scmp.ne.s32.totalorder %s39, %s42
      %p48 = scmp.eq.s32.totalorder %s17, 0
      %p49 = por %p47, %p48
      %p50 = scmp.ne.s32.totalorder %s39, %s42
      %p51 = scmp.eq.s32.totalorder %s22, 3
      %p52 = por %p50, %p51
      %p53 = scmp.ne.s32.totalorder %s42, %s43
      %p54 = scmp.eq.s32.totalorder %s22, 0
      %p55 = por %p53, %p54
      %p56 = scmp.ne.s32.totalorder %s42, %s43
      %p57 = scmp.eq.s32.totalorder %s23, 3
      %p58 = por %p56, %p57
      %p60 = scmp.ne.s32.totalorder %s43, %s59
      %p61 = scmp.eq.s32.totalorder %s23, 0
      %p62 = por %p60, %p61
      %s63 = ssub.s32 %s24, %s36
      %s64 = ssub.s32 %s25, %s32
      %s65 = sor.u32 %s63, %s64
      %p66 = scmp.eq.s32.totalorder %s65, 0
      %s68 = sadd.s32 %s67, 1
      %s69 = scalar_select %p66, %s67, %s68
      %p72 = pneg %p66
      %p73 = scmp.eq.s32.totalorder %s17, 3
      %p74 = por %p72, %p73
      %p75 = scmp.ne.s32.totalorder %s67, %s70
      %p76 = scmp.eq.s32.totalorder %s17, 0
      %p77 = por %p75, %p76
      %p78 = scmp.ne.s32.totalorder %s67, %s70
      %p79 = scmp.eq.s32.totalorder %s22, 3
      %p80 = por %p78, %p79
      %p81 = scmp.ne.s32.totalorder %s70, %s71
      %p82 = scmp.eq.s32.totalorder %s22, 0
      %p83 = por %p81, %p82
      %p84 = scmp.ne.s32.totalorder %s70, %s71
      %p85 = scmp.eq.s32.totalorder %s23, 3
      %p86 = por %p84, %p85
      %p88 = scmp.ne.s32.totalorder %s71, %s87
      %p89 = scmp.eq.s32.totalorder %s23, 0
      %p90 = por %p88, %p89
      %s91 = ssub.s32 %s24, %s36
      %s92 = ssub.s32 %s25, %s32
      %s93 = sor.u32 %s91, %s92
      %p94 = scmp.eq.s32.totalorder %s93, 0
      %s96 = sadd.s32 %s95, 1
      %s97 = scalar_select %p94, %s95, %s96
      %p100 = pneg %p94
      %p101 = scmp.eq.s32.totalorder %s17, 3
      %p102 = por %p100, %p101
      %p103 = scmp.ne.s32.totalorder %s95, %s98
      %p104 = scmp.eq.s32.totalorder %s17, 0
      %p105 = por %p103, %p104
      %p106 = scmp.ne.s32.totalorder %s95, %s98
      %p107 = scmp.eq.s32.totalorder %s22, 3
      %p108 = por %p106, %p107
      %p109 = scmp.ne.s32.totalorder %s98, %s99
      %p110 = scmp.eq.s32.totalorder %s22, 0
      %p111 = por %p109, %p110
      %p112 = scmp.ne.s32.totalorder %s98, %s99
      %p113 = scmp.eq.s32.totalorder %s23, 3
      %p114 = por %p112, %p113
      %p116 = scmp.ne.s32.totalorder %s99, %s115
      %p117 = scmp.eq.s32.totalorder %s23, 0
      %p118 = por %p116, %p117
      %p119 = scmp.le.s32.totalorder 1, %s17
      %p120 = scmp.lt.s32.totalorder %s17, 5
      %p121 = pnand %p119, %p120
      %p122 = pneg %p121
      // Predicated region
      $region9: #{tpu_custom_call.1} parent=5 // pred_check
        _
      $region10: #{tpu_custom_call.1} parent=5 // pred_check_branch
        %124 = sbr.rel (%p121) target = $region12
      $region11: #{tpu_custom_call.1} parent=5 // pred_region
        %s125 = ssub.s32 %s17, 1
      $region12: #{tpu_custom_call.1} parent=5 // pred_fallthru
        _
      %p126 = scmp.lt.s32.totalorder %s17, 4
      // Predicated region
      $region13: #{tpu_custom_call.1} parent=5 // pred_check
        %p127 = pneg %p126
      $region14: #{tpu_custom_call.1} parent=5 // pred_check_branch
        %129 = sbr.rel (%p127) target = $region16
      $region15: #{tpu_custom_call.1} parent=5 // pred_region
        // Predicated region
        $region17: #{tpu_custom_call.1} parent=15 // pred_check
          %p130 = pneg %p49
        $region18: #{tpu_custom_call.1} parent=15 // pred_check_branch
          %132 = sbr.rel (%p130) target = $region20
        $region19: #{tpu_custom_call.1} parent=15 // pred_region
          %s133 = sand.u32 %s39, 1
          %s134 = scalar_lea.sflag [#allocation3], %s133
          %s135 = sand.u32 %s39, 1
          %s136 = smul.addr %s135, 4
          %s137 = scalar_lea.vmem [#allocation2], %s136
          %139 = vsyncadd %s134, 0
          %s140 = smul.addr %s24, 4
          %s141 = scalar_lea.hbm %s0, %s140
          %s143 = sshll.u32 %s141, 4
          %s144 = int_to_ptr.hbm [resolvable:$true] %s143
          %s145 = sshll.u32 %s137, 4
          %s146 = int_to_ptr.vmem [resolvable:$true] %s145
          %148 = dma.hbm_to_vmem [thread:$0]  %s144, 64, %s146, %s134
        $region20: #{tpu_custom_call.1} parent=15 // pred_fallthru
          _
        // Predicated region
        $region21: #{tpu_custom_call.1} parent=15 // pred_check
          %p149 = pneg %p77
        $region22: #{tpu_custom_call.1} parent=15 // pred_check_branch
          %151 = sbr.rel (%p149) target = $region24
        $region23: #{tpu_custom_call.1} parent=15 // pred_region
          %s152 = sand.u32 %s67, 1
          %s153 = scalar_lea.sflag [#allocation6], %s152
          %s154 = sand.u32 %s67, 1
          %s155 = smul.addr %s154, 4
          %s156 = scalar_lea.vmem [#allocation5], %s155
          %158 = vsyncadd %s153, 0
          %s159 = smul.addr %s24, 2
          %s160 = sadd.s32 %s25, %s159
          %s161 = smul.addr %s160, 4
          %s162 = scalar_lea.hbm %s1, %s161
          %s164 = sshll.u32 %s162, 4
          %s165 = int_to_ptr.hbm [resolvable:$true] %s164
          %s166 = sshll.u32 %s156, 4
          %s167 = int_to_ptr.vmem [resolvable:$true] %s166
          %169 = dma.hbm_to_vmem [thread:$0]  %s165, 64, %s167, %s153
        $region24: #{tpu_custom_call.1} parent=15 // pred_fallthru
          _
      $region16: #{tpu_custom_call.1} parent=5 // pred_fallthru
        _
      %p170 = scmp.le.s32.totalorder 1, %s17
      %p171 = scmp.lt.s32.totalorder %s17, 5
      %p172 = pnand %p170, %p171
      %p173 = pneg %p172
      // Predicated region
      $region25: #{tpu_custom_call.1} parent=5 // pred_check
        _
      $region26: #{tpu_custom_call.1} parent=5 // pred_check_branch
        %175 = sbr.rel (%p172) target = $region28
      $region27: #{tpu_custom_call.1} parent=5 // pred_region
        %s176 = ssub.s32 %s17, 1
        %s177 = sand.u32 %s42, 1
        %s178 = scalar_lea.sflag [#allocation3], %s177
        %s179 = sand.u32 %s42, 1
        %s180 = smul.addr %s179, 4
        %s181 = scalar_lea.vmem [#allocation2], %s180
        // Predicated region
        $region29: #{tpu_custom_call.1} parent=27 // pred_check
          %p182 = pneg %p55
        $region30: #{tpu_custom_call.1} parent=27 // pred_check_branch
          %184 = sbr.rel (%p182) target = $region32
        $region31: #{tpu_custom_call.1} parent=27 // pred_region
          %186 = dma.done %s178, 64
        $region32: #{tpu_custom_call.1} parent=27 // pred_fallthru
          _
        %s187 = sand.u32 %s70, 1
        %s188 = scalar_lea.sflag [#allocation6], %s187
        %s189 = sand.u32 %s70, 1
        %s190 = smul.addr %s189, 4
        %s191 = scalar_lea.vmem [#allocation5], %s190
        // Predicated region
        $region33: #{tpu_custom_call.1} parent=27 // pred_check
          %p192 = pneg %p83
        $region34: #{tpu_custom_call.1} parent=27 // pred_check_branch
          %194 = sbr.rel (%p192) target = $region36
        $region35: #{tpu_custom_call.1} parent=27 // pred_region
          %196 = dma.done %s188, 64
        $region36: #{tpu_custom_call.1} parent=27 // pred_fallthru
          _
        %s197 = sand.u32 %s42, 1
        %s198 = scalar_lea.sflag [#allocation3], %s197
        %s199 = sand.u32 %s42, 1
        %s200 = smul.addr %s199, 4
        %s201 = scalar_lea.vmem [#allocation2], %s200
        %p202 = pneg %p55
        %p203 = pneg %p52
        %s204 = sand.u32 %s70, 1
        %s205 = scalar_lea.sflag [#allocation6], %s204
        %s206 = sand.u32 %s70, 1
        %s207 = smul.addr %s206, 4
        %s208 = scalar_lea.vmem [#allocation5], %s207
        %p209 = pneg %p83
        %p210 = pneg %p80
        %p211 = pneg %p111
        %p212 = pneg %p108
        %s213 = sand.u32 %s98, 1
        %s214 = scalar_lea.sflag [#allocation4], %s213
        %s215 = sand.u32 %s98, 1
        %s216 = smul.addr %s215, 16
        %s217 = scalar_lea.vmem [#allocation7], %s216
        %v218 = vld [vmem:[%s181] sm:$0xf]
        %v219 = vld [vmem:[%s191] sm:$0xf]
        %220 = vxpose.xlu0.b32.start [1/16] %v218, 128
        %221 = vxpose.xlu0.b32.cont [2/16] 0.0, 128
        %222 = vxpose.xlu0.b32.cont [3/16] 0.0, 128
        %223 = vxpose.xlu0.b32.cont [4/16] 0.0, 128
        %224 = vxpose.xlu0.b32.cont [5/16] 0.0, 128
        %225 = vxpose.xlu0.b32.cont [6/16] 0.0, 128
        %226 = vxpose.xlu0.b32.cont [7/16] 0.0, 128
        %227 = vxpose.xlu0.b32.cont [8/16] 0.0, 128
        %228 = vxpose.xlu0.b32.cont [9/16] 0.0, 128
        %229 = vxpose.xlu0.b32.cont [10/16] 0.0, 128
        %230 = vxpose.xlu0.b32.cont [11/16] 0.0, 128
        %231 = vxpose.xlu0.b32.cont [12/16] 0.0, 128
        %232 = vxpose.xlu0.b32.cont [13/16] 0.0, 128
        %233 = vxpose.xlu0.b32.cont [14/16] 0.0, 128
        %234 = vxpose.xlu0.b32.cont [15/16] 0.0, 128
        %235 = vxpose.xlu0.b32.end [16/16] 0.0, 128
        %v236 = vpop.trf.xlu0
        %v237 = vpop.trf.xlu0
        %v238 = vpop.trf.xlu0
        %v239 = vpop.trf.xlu0
        %v240 = vpop.trf.xlu0
        %v241 = vpop.trf.xlu0
        %v242 = vpop.trf.xlu0
        %v243 = vpop.trf.xlu0
        %v244 = vpop.trf.xlu0
        %v245 = vpop.trf.xlu0
        %v246 = vpop.trf.xlu0
        %v247 = vpop.trf.xlu0
        %v248 = vpop.trf.xlu0
        %v249 = vpop.trf.xlu0
        %v250 = vpop.trf.xlu0
        %v251 = vpop.trf.xlu0
        %vm252 = vcmask 31744
        %v254 = vsel %vm252, %v236, 0
        %v257 = vsel %vm252, %v237, 0
        %vm259 = vcmask 1043456
        %v261 = vsel %vm259, %v219, 0
        %263 = vmatpush.msra.mxu0 0.0
        %264 = vmatpush.msra.mxu0 0.0
        %265 = vmatpush.msra.mxu0 0.0
        %266 = vmatpush.msra.mxu0 0.0
        %267 = vmatpush.msra.mxu0 0.0
        %268 = vmatpush.msra.mxu0 0.0
        %269 = vmatpush.msra.mxu0 0.0
        %270 = vmatpush.msra.mxu0 0.0
        %271 = vmatpush.msra.mxu0 0.0
        %272 = vmatpush.msra.mxu0 0.0
        %273 = vmatpush.msra.mxu0 0.0
        %274 = vmatpush.msra.mxu0 0.0
        %275 = vmatpush.msra.mxu0 0.0
        %276 = vmatpush.msra.mxu0 0.0
        %277 = vmatpush.msra.mxu0 0.0
        %278 = vmatpush.msra.mxu0 %v261
        %279 = vmatmul.f32.gmra.mxu0 %v254
        %v280 = vpop.f32.mrf.mxu0
        %v281 = vadd.f32 0.0, %v280
        %282 = vmatmul.f32.gmra.mxu0 %v257
        %v283 = vpop.f32.mrf.mxu0
        %v284 = vadd.f32 0.0, %v283
        %285 = vdwg.mxu0
        %v286 = vmul.f32 %v281, 0.001
        %v287 = vmul.f32 %v284, 0.001
        %288 = vst [vmem:[%s217] sm:$0xff] %v286
        %289 = vst [vmem:[%s217 + $0x8] sm:$0xff] %v287
        %s290 = sand.u32 %s98, 1
        %s291 = scalar_lea.sflag [#allocation4], %s290
        %s292 = sand.u32 %s98, 1
        %s293 = smul.addr %s292, 16
        %s294 = scalar_lea.vmem [#allocation7], %s293
        // Predicated region
        $region37: #{tpu_custom_call.1} parent=27 // pred_check
          %p295 = pneg %p108
        $region38: #{tpu_custom_call.1} parent=27 // pred_check_branch
          %297 = sbr.rel (%p295) target = $region40
        $region39: #{tpu_custom_call.1} parent=27 // pred_region
          %299 = vsyncadd %s291, 0
          %s300 = smul.addr %s26, 4
          %s301 = sadd.s32 %s27, %s300
          %s302 = smul.addr %s301, 8
          %s303 = scalar_lea.hbm %s2, %s302
          %s304 = sshll.u32 %s294, 4
          %s305 = int_to_ptr.vmem [resolvable:$true] %s304
          %s306 = sshll.u32 %s303, 4
          %s307 = int_to_ptr.hbm [resolvable:$true] %s306
          %312 = dma.vmem_to_hbm [thread:$0]  %s305, 256, %s307, %s291, 128, 256, 8
        $region40: #{tpu_custom_call.1} parent=27 // pred_fallthru
          _
      $region28: #{tpu_custom_call.1} parent=5 // pred_fallthru
        _
      %p313 = scmp.le.s32.totalorder 2, %s17
      // Predicated region
      $region41: #{tpu_custom_call.1} parent=5 // pred_check
        %p314 = pneg %p313
      $region42: #{tpu_custom_call.1} parent=5 // pred_check_branch
        %316 = sbr.rel (%p314) target = $region44
      $region43: #{tpu_custom_call.1} parent=5 // pred_region
        %s317 = ssub.s32 %s17, 2
        // Predicated region
        $region45: #{tpu_custom_call.1} parent=43 // pred_check
          %p318 = pneg %p114
        $region46: #{tpu_custom_call.1} parent=43 // pred_check_branch
          %320 = sbr.rel (%p318) target = $region48
        $region47: #{tpu_custom_call.1} parent=43 // pred_region
          %s321 = sand.u32 %s99, 1
          %s322 = scalar_lea.sflag [#allocation4], %s321
          %s323 = sand.u32 %s99, 1
          %s324 = smul.addr %s323, 16
          %s325 = scalar_lea.vmem [#allocation7], %s324
          %327 = dma.done %s322, 256
        $region48: #{tpu_custom_call.1} parent=43 // pred_fallthru
          _
      $region44: #{tpu_custom_call.1} parent=5 // pred_fallthru
        _
    $region6: #{tpu_custom_call.1} parent=1 // loop_footer
      %s21 = sadd.s32 1, %s17
    $region7: #{tpu_custom_call.1} parent=1 // loop_footer_branch
      %16 = sbr.rel target = $region3
    $region8: #{tpu_custom_call.1} parent=1 // loop_exit
      _
    %328 = vsyncpa [#allocation3], 1
    %s329 = scalar_lea.sflag [#allocation3], 1
    %330 = vsyncpa %s329, 1
    %331 = vsyncpa [#allocation6], 1
    %s332 = scalar_lea.sflag [#allocation6], 1
    %333 = vsyncpa %s332, 1
    %334 = vsyncpa [#allocation4], 1
    %s335 = scalar_lea.sflag [#allocation4], 1
    %336 = vsyncpa %s335, 1

</llo_original>
